<compile_context>
chip_gen: v7x
topology: tpu7x:2x2x1
jax: 0.10.0
libtpu: 0.0.40
codegen_flags: <defaults>
</compile_context>

<pallas_src>
import functools

import jax
import jax.numpy as jnp
from jax.experimental import pallas as pl
from jax.experimental.pallas import tpu as pltpu

GAMMA = 1e-4
ALPHA = 0.9
LANE = 128
SUBLANE = 8
NEG_MASK = -1e30  # logit bias for padded class columns -> exp underflows to 0


def _ceil_to(x, m):
    return (x + m - 1) // m * m


def _pad_to(a, shape):
    return jnp.pad(a, [(0, t - s) for s, t in zip(a.shape, shape)])


def ckaformer_kernel(x_ref, fnw_ref, fnb_ref, wm_ref, w1_ref, b1_ref,
                     w2_ref, b2_ref, out_ref, *, depth, n):
    """Whole CKAFormer (depth x [L2norm->Compression->Annihilation] -> FFN)
    in one VMEM-resident kernel.  All shapes are lane-padded to 128."""
    X = x_ref[...]                                          # (Np, Dp) f32
    Np, Dp = X.shape
    Cp = fnb_ref.shape[-1]

    # Compile-time folded scalars: no per-layer divides on the VPU path.
    c_wm = jnp.float32(GAMMA * ALPHA)
    c_px = jnp.float32(GAMMA * (1.0 - ALPHA) / n)
    c_cov = jnp.float32(GAMMA / n)

    # Hoisted (JAX does not CSE broadcast/iota): mask for padded rows so they
    # never acquire nonzero values and never pollute PᵀX / the Gram matrix.
    row_ids = jax.lax.broadcasted_iota(jnp.int32, (Np, Cp), 0)
    valid_row = row_ids < n

    def lane_dot(a, b):
        # a @ b.T — contract over the last (lane) axis of both operands
        # (MXU-natural, no sublane transpose through the XLU).
        return jax.lax.dot_general(a, b, (((1,), (1,)), ((), ())),
                                   preferred_element_type=jnp.float32)

    for i in range(depth):  # depth is static & tiny -> unrolled at trace time
        # ---- LayerNorm: row-wise L2 normalisation (EUP rsqrt) ----
        ss = jnp.sum(X * X, axis=-1, keepdims=True)
        X = X * jax.lax.rsqrt(jnp.maximum(ss, jnp.float32(1e-30)))

        # bf16 only inside γ-damped correction terms (error scaled by ~1e-4).
        Xb = X.astype(jnp.bfloat16)

        # ---- Compression ----
        logits = jnp.dot(Xb, fnw_ref[i],                     # fnw stored bf16
                         preferred_element_type=jnp.float32) + fnb_ref[i]
        logits = logits - jnp.max(logits, axis=-1, keepdims=True)  # safe softmax
        e = jnp.exp(logits)                                  # padded classes -> 0
        P = e * pl.reciprocal(jnp.sum(e, axis=-1, keepdims=True), approx=True)
        P = jnp.where(valid_row, P, 0.0)                     # kill padded rows
        Pb = P.astype(jnp.bfloat16)

        # X += γα·P@wm + γ(1-α)/n·(P@Pᵀ)@X   (== γ·P@M, M = α·wm + (1-α)/n·PᵀX)
        ppt = lane_dot(Pb, Pb)                               # (Np, Np)
        X = (X
             + c_wm * jnp.dot(Pb, wm_ref[i],                 # wm stored bf16
                              preferred_element_type=jnp.float32)
             + c_px * jnp.dot(ppt.astype(jnp.bfloat16), Xb,
                              preferred_element_type=jnp.float32))

        # ---- Annihilation:  X -= (γ/n)·(X@Xᵀ)@X   (Gram form, N << dim) ----
        Xb = X.astype(jnp.bfloat16)
        G = lane_dot(Xb, Xb)                                 # (Np, Np)
        X = X - c_cov * jnp.dot(G.astype(jnp.bfloat16), Xb,
                                preferred_element_type=jnp.float32)

    # ---- FeedForwardClassifier (f32: not γ-damped, keeps 1e-4 accuracy) ----
    h = jnp.maximum(
        jnp.dot(X, w1_ref[...], preferred_element_type=jnp.float32)
        + b1_ref[...], 0.0)
    out_ref[...] = (jnp.dot(h, w2_ref[...], preferred_element_type=jnp.float32)
                    + b2_ref[...]).astype(out_ref.dtype)


def prepare_params(fnw, fnb, wm, w1, b1, w2, b2):
    """One-time parameter prep: transpose + lane-pad to 128 + dtype choice.

    fnw: (depth, C, D)  fnb: (depth, C)  wm: (depth, C, D)
    w1: (H, D)  b1: (H,)  w2: (O, H)  b2: (O,)
    """
    depth, num_classes, dim = fnw.shape
    hidden = w1.shape[0]
    out_dim = w2.shape[0]
    dp = _ceil_to(dim, LANE)
    cp = _ceil_to(num_classes, LANE)
    hp = _ceil_to(hidden, LANE)
    op = _ceil_to(out_dim, LANE)

    # bf16 storage for the γ-damped operands (halves their HBM->VMEM DMA).
    fnw_t = _pad_to(jnp.transpose(fnw, (0, 2, 1)).astype(jnp.float32),
                    (depth, dp, cp)).astype(jnp.bfloat16)
    wm_p = _pad_to(wm.astype(jnp.float32), (depth, cp, dp)).astype(jnp.bfloat16)
    # Padded class columns carry a -1e30 logit bias -> softmax ignores them.
    fnb_p = jnp.full((depth, 1, cp), NEG_MASK, jnp.float32)
    fnb_p = fnb_p.at[:, 0, :num_classes].set(fnb.astype(jnp.float32))
    # Classifier stays f32.
    w1_t = _pad_to(w1.T.astype(jnp.float32), (dp, hp))
    b1_p = _pad_to(b1[None, :].astype(jnp.float32), (1, hp))
    w2_t = _pad_to(w2.T.astype(jnp.float32), (hp, op))
    b2_p = _pad_to(b2[None, :].astype(jnp.float32), (1, op))
    return dict(fnw=fnw_t, fnb=fnb_p, wm=wm_p, w1=w1_t, b1=b1_p,
                w2=w2_t, b2=b2_p)


@functools.partial(jax.jit, static_argnames=("out_dim",))
def _forward_impl(x, params, *, out_dim):
    """Pads x, runs the fused kernel, slices the result — all inside one jit."""
    n, dim = x.shape
    depth, dp, cp = params["fnw"].shape
    hp = params["w1"].shape[1]
    op = params["w2"].shape[1]
    np_ = _ceil_to(n, SUBLANE)

    xp = _pad_to(x.astype(jnp.float32), (np_, dp))
    args = (xp, params["fnw"], params["fnb"], params["wm"],
            params["w1"], params["b1"], params["w2"], params["b2"])

    flops_layer = 2 * np_ * (dp * cp + cp * np_ + np_ * dp     # compression
                             + cp * dp + dp * np_ + np_ * dp)  # means + gram
    flops = depth * flops_layer + 2 * np_ * (dp * hp + hp * op)
    bytes_accessed = sum(int(a.size) * a.dtype.itemsize for a in args) + np_ * op * 4
    cost = pl.CostEstimate(flops=flops,
                           transcendentals=depth * np_ * (cp + 2),
                           bytes_accessed=bytes_accessed)

    kernel = functools.partial(ckaformer_kernel, depth=depth, n=n)
    out_p = pl.pallas_call(
        kernel,
        out_shape=jax.ShapeDtypeStruct((np_, op), jnp.float32),
        in_specs=[pl.BlockSpec(memory_space=pltpu.MemorySpace.VMEM)
                  for _ in args],
        out_specs=pl.BlockSpec(memory_space=pltpu.MemorySpace.VMEM),
        cost_estimate=cost,
    )(*args)
    return out_p[:n, :out_dim]


def ckaformer_forward(x, params, out_dim):
    out = _forward_impl(x, params, out_dim=out_dim)
    depth = params["fnw"].shape[0]
    # TODO(synk): updated buffers (weighted_means / running_cov) are not
    # materialized as kernel outputs; stats mirrors the module's lc/rc values.
    stats = {"lc": [GAMMA] * depth, "rc": [GAMMA] * depth}
    return out, stats


def reference_forward(x, fnw, fnb, wm, w1, b1, w2, b2, depth):
    """Pure-JAX mirror of the PyTorch forward (training mode, fresh running_cov)."""
    X = x.astype(jnp.float32)
    n = X.shape[0]
    for i in range(depth):
        X = X / jnp.linalg.norm(X, axis=-1, keepdims=True)
        P = jax.nn.softmax(X @ fnw[i].T + fnb[i], axis=-1)
        M = ALPHA * wm[i] + (1.0 - ALPHA) * (P.T @ X) / n
        X = X + GAMMA * P @ M
        C = X.T @ X / n
        X = X - GAMMA * X @ C
    h = jnp.maximum(X @ w1.T + b1, 0.0)
    return h @ w2.T + b2


if __name__ == "__main__":
    dim, num_classes, out_dim, depth = 32, 4, 8, 2

    key = jax.random.PRNGKey(0)
    ks = jax.random.split(key, 8)

    # Deterministic synthetic parameters (PyTorch-like fan-in scaling).
    fnw = jax.random.normal(ks[1], (depth, num_classes, dim), jnp.float32) / jnp.sqrt(dim)
    fnb = jax.random.normal(ks[2], (depth, num_classes), jnp.float32) * 0.1
    # weighted_means buffer: small nonzero state (exercises the P@wm path).
    wm = jax.random.normal(ks[3], (depth, num_classes, dim), jnp.float32) * 0.05
    w1 = jax.random.normal(ks[4], (16, dim), jnp.float32) / jnp.sqrt(dim)
    b1 = jax.random.normal(ks[5], (16,), jnp.float32) * 0.1
    w2 = jax.random.normal(ks[6], (out_dim, 16), jnp.float32) / jnp.sqrt(16.0)
    b2 = jax.random.normal(ks[7], (out_dim,), jnp.float32) * 0.1

    params = prepare_params(fnw, fnb, wm, w1, b1, w2, b2)   # one-time prep

    # N=8 (no padding) and N=6 (exercises padded-row masking, np_=8 > n).
    for n_rows in (8, 6):
        x = jax.random.normal(ks[0], (n_rows, dim), jnp.float32)
        out, stats = ckaformer_forward(x, params, out_dim)
        out = jax.block_until_ready(out)

        ref = reference_forward(x, fnw, fnb, wm, w1, b1, w2, b2, depth)
        assert out.shape == (n_rows, out_dim)
        assert jnp.allclose(out, ref, atol=1e-4, rtol=1e-4), (
            f"mismatch (n={n_rows}): max abs err {jnp.max(jnp.abs(out - ref))}")
    print("KERNEL_OK")
</pallas_src>

<mosaic_0001>
module attributes {stable_mosaic.version = 11 : i64} {
  func.func @ckaformer_kernel(%arg0: memref<8x128xf32, #tpu.memory_space<vmem>>, %arg1: memref<2x128x128xbf16, #tpu.memory_space<vmem>>, %arg2: memref<2x1x128xf32, #tpu.memory_space<vmem>>, %arg3: memref<2x128x128xbf16, #tpu.memory_space<vmem>>, %arg4: memref<128x128xf32, #tpu.memory_space<vmem>>, %arg5: memref<1x128xf32, #tpu.memory_space<vmem>>, %arg6: memref<128x128xf32, #tpu.memory_space<vmem>>, %arg7: memref<1x128xf32, #tpu.memory_space<vmem>>, %arg8: memref<8x128xf32, #tpu.memory_space<vmem>>) attributes {dimension_semantics = [], scalar_prefetch = 0 : i64, scratch_operands = 0 : i64, tpu.core_type = #tpu.core_type<tc>} {
    %c0 = arith.constant 0 : index
    %c0_0 = arith.constant 0 : index
    %0 = vector.load %arg0[%c0, %c0_0] : memref<8x128xf32, #tpu.memory_space<vmem>>, vector<8x128xf32>
    %1 = tpu.iota {dimensions = array<i32: 0>} : vector<8x128xi32>
    %c8_i32 = arith.constant 8 : i32
    %2 = vector.broadcast %c8_i32 : i32 to vector<8x128xi32>
    %3 = arith.cmpi slt, %1, %2 : vector<8x128xi32>
    %4 = arith.mulf %0, %0 : vector<8x128xf32>
    %cst = arith.constant dense<0.000000e+00> : vector<8xf32>
    %5 = vector.multi_reduction <add>, %4, %cst [1] : vector<8x128xf32> to vector<8xf32>
    %6 = vector.shape_cast %5 : vector<8xf32> to vector<8x1xf32>
    %cst_1 = arith.constant 1.000000e-30 : f32
    %7 = vector.broadcast %cst_1 : f32 to vector<8x1xf32>
    %8 = arith.maximumf %6, %7 : vector<8x1xf32>
    %9 = math.rsqrt %8 : vector<8x1xf32>
    %10 = vector.broadcast %9 : vector<8x1xf32> to vector<8x128xf32>
    %11 = arith.mulf %0, %10 : vector<8x128xf32>
    %12 = arith.truncf %11 : vector<8x128xf32> to vector<8x128xbf16>
    %c0_2 = arith.constant 0 : index
    %c0_3 = arith.constant 0 : index
    %c0_4 = arith.constant 0 : index
    %13 = vector.load %arg1[%c0_2, %c0_3, %c0_4] : memref<2x128x128xbf16, #tpu.memory_space<vmem>>, vector<1x128x128xbf16>
    %14 = vector.shape_cast %13 : vector<1x128x128xbf16> to vector<128x128xbf16>
    %cst_5 = arith.constant dense<0.000000e+00> : vector<8x128xf32>
    %15 = tpu.matmul %12, %14, %cst_5 {dimension_numbers = #tpu.dot_dimension_numbers<[1], [0], [0], [1], [0, 0, 1, 1], [], []>} : vector<8x128xbf16>, vector<128x128xbf16>, vector<8x128xf32> -> vector<8x128xf32>
    %c0_6 = arith.constant 0 : index
    %c0_7 = arith.constant 0 : index
    %c0_8 = arith.constant 0 : index
    %16 = vector.load %arg2[%c0_6, %c0_7, %c0_8] : memref<2x1x128xf32, #tpu.memory_space<vmem>>, vector<1x1x128xf32>
    %17 = vector.shape_cast %16 : vector<1x1x128xf32> to vector<1x128xf32>
    %18 = vector.broadcast %17 : vector<1x128xf32> to vector<8x128xf32>
    %19 = arith.addf %15, %18 : vector<8x128xf32>
    %cst_9 = arith.constant dense<0xFF800000> : vector<8xf32>
    %20 = vector.multi_reduction <maximumf>, %19, %cst_9 [1] : vector<8x128xf32> to vector<8xf32>
    %21 = vector.shape_cast %20 : vector<8xf32> to vector<8x1xf32>
    %22 = vector.broadcast %21 : vector<8x1xf32> to vector<8x128xf32>
    %23 = arith.subf %19, %22 : vector<8x128xf32>
    %24 = math.exp %23 : vector<8x128xf32>
    %cst_10 = arith.constant dense<0.000000e+00> : vector<8xf32>
    %25 = vector.multi_reduction <add>, %24, %cst_10 [1] : vector<8x128xf32> to vector<8xf32>
    %26 = vector.shape_cast %25 : vector<8xf32> to vector<8x1xf32>
    %27 = tpu.reciprocal %26 {approx = true} : vector<8x1xf32> -> vector<8x1xf32>
    %28 = vector.broadcast %27 : vector<8x1xf32> to vector<8x128xf32>
    %29 = arith.mulf %24, %28 : vector<8x128xf32>
    %cst_11 = arith.constant 0.000000e+00 : f32
    %30 = vector.broadcast %cst_11 : f32 to vector<8x128xf32>
    %31 = arith.select %3, %29, %30 : vector<8x128xi1>, vector<8x128xf32>
    %32 = arith.truncf %31 : vector<8x128xf32> to vector<8x128xbf16>
    %cst_12 = arith.constant dense<0.000000e+00> : vector<8x8xf32>
    %33 = tpu.matmul %32, %32, %cst_12 {dimension_numbers = #tpu.dot_dimension_numbers<[1], [1], [0], [0], [0, 0, 1, 0], [], []>} : vector<8x128xbf16>, vector<8x128xbf16>, vector<8x8xf32> -> vector<8x8xf32>
    %c0_13 = arith.constant 0 : index
    %c0_14 = arith.constant 0 : index
    %c0_15 = arith.constant 0 : index
    %34 = vector.load %arg3[%c0_13, %c0_14, %c0_15] : memref<2x128x128xbf16, #tpu.memory_space<vmem>>, vector<1x128x128xbf16>
    %35 = vector.shape_cast %34 : vector<1x128x128xbf16> to vector<128x128xbf16>
    %cst_16 = arith.constant dense<0.000000e+00> : vector<8x128xf32>
    %36 = tpu.matmul %32, %35, %cst_16 {dimension_numbers = #tpu.dot_dimension_numbers<[1], [0], [0], [1], [0, 0, 1, 1], [], []>} : vector<8x128xbf16>, vector<128x128xbf16>, vector<8x128xf32> -> vector<8x128xf32>
    %cst_17 = arith.constant 9.000000e-05 : f32
    %37 = vector.broadcast %cst_17 : f32 to vector<8x128xf32>
    %38 = arith.mulf %37, %36 : vector<8x128xf32>
    %39 = arith.addf %11, %38 : vector<8x128xf32>
    %40 = arith.truncf %33 : vector<8x8xf32> to vector<8x8xbf16>
    %cst_18 = arith.constant dense<0.000000e+00> : vector<8x128xf32>
    %41 = tpu.matmul %40, %12, %cst_18 {dimension_numbers = #tpu.dot_dimension_numbers<[1], [0], [0], [1], [0, 0, 1, 1], [], []>} : vector<8x8xbf16>, vector<8x128xbf16>, vector<8x128xf32> -> vector<8x128xf32>
    %cst_19 = arith.constant 1.250000e-06 : f32
    %42 = vector.broadcast %cst_19 : f32 to vector<8x128xf32>
    %43 = arith.mulf %42, %41 : vector<8x128xf32>
    %44 = arith.addf %39, %43 : vector<8x128xf32>
    %45 = arith.truncf %44 : vector<8x128xf32> to vector<8x128xbf16>
    %cst_20 = arith.constant dense<0.000000e+00> : vector<8x8xf32>
    %46 = tpu.matmul %45, %45, %cst_20 {dimension_numbers = #tpu.dot_dimension_numbers<[1], [1], [0], [0], [0, 0, 1, 0], [], []>} : vector<8x128xbf16>, vector<8x128xbf16>, vector<8x8xf32> -> vector<8x8xf32>
    %47 = arith.truncf %46 : vector<8x8xf32> to vector<8x8xbf16>
    %cst_21 = arith.constant dense<0.000000e+00> : vector<8x128xf32>
    %48 = tpu.matmul %47, %45, %cst_21 {dimension_numbers = #tpu.dot_dimension_numbers<[1], [0], [0], [1], [0, 0, 1, 1], [], []>} : vector<8x8xbf16>, vector<8x128xbf16>, vector<8x128xf32> -> vector<8x128xf32>
    %cst_22 = arith.constant 1.250000e-05 : f32
    %49 = vector.broadcast %cst_22 : f32 to vector<8x128xf32>
    %50 = arith.mulf %49, %48 : vector<8x128xf32>
    %51 = arith.subf %44, %50 : vector<8x128xf32>
    %52 = arith.mulf %51, %51 : vector<8x128xf32>
    %cst_23 = arith.constant dense<0.000000e+00> : vector<8xf32>
    %53 = vector.multi_reduction <add>, %52, %cst_23 [1] : vector<8x128xf32> to vector<8xf32>
    %54 = vector.shape_cast %53 : vector<8xf32> to vector<8x1xf32>
    %cst_24 = arith.constant 1.000000e-30 : f32
    %55 = vector.broadcast %cst_24 : f32 to vector<8x1xf32>
    %56 = arith.maximumf %54, %55 : vector<8x1xf32>
    %57 = math.rsqrt %56 : vector<8x1xf32>
    %58 = vector.broadcast %57 : vector<8x1xf32> to vector<8x128xf32>
    %59 = arith.mulf %51, %58 : vector<8x128xf32>
    %60 = arith.truncf %59 : vector<8x128xf32> to vector<8x128xbf16>
    %c1 = arith.constant 1 : index
    %c0_25 = arith.constant 0 : index
    %c0_26 = arith.constant 0 : index
    %61 = vector.load %arg1[%c1, %c0_25, %c0_26] : memref<2x128x128xbf16, #tpu.memory_space<vmem>>, vector<1x128x128xbf16>
    %62 = vector.shape_cast %61 : vector<1x128x128xbf16> to vector<128x128xbf16>
    %cst_27 = arith.constant dense<0.000000e+00> : vector<8x128xf32>
    %63 = tpu.matmul %60, %62, %cst_27 {dimension_numbers = #tpu.dot_dimension_numbers<[1], [0], [0], [1], [0, 0, 1, 1], [], []>} : vector<8x128xbf16>, vector<128x128xbf16>, vector<8x128xf32> -> vector<8x128xf32>
    %c1_28 = arith.constant 1 : index
    %c0_29 = arith.constant 0 : index
    %c0_30 = arith.constant 0 : index
    %64 = vector.load %arg2[%c1_28, %c0_29, %c0_30] : memref<2x1x128xf32, #tpu.memory_space<vmem>>, vector<1x1x128xf32>
    %65 = vector.shape_cast %64 : vector<1x1x128xf32> to vector<1x128xf32>
    %66 = vector.broadcast %65 : vector<1x128xf32> to vector<8x128xf32>
    %67 = arith.addf %63, %66 : vector<8x128xf32>
    %cst_31 = arith.constant dense<0xFF800000> : vector<8xf32>
    %68 = vector.multi_reduction <maximumf>, %67, %cst_31 [1] : vector<8x128xf32> to vector<8xf32>
    %69 = vector.shape_cast %68 : vector<8xf32> to vector<8x1xf32>
    %70 = vector.broadcast %69 : vector<8x1xf32> to vector<8x128xf32>
    %71 = arith.subf %67, %70 : vector<8x128xf32>
    %72 = math.exp %71 : vector<8x128xf32>
    %cst_32 = arith.constant dense<0.000000e+00> : vector<8xf32>
    %73 = vector.multi_reduction <add>, %72, %cst_32 [1] : vector<8x128xf32> to vector<8xf32>
    %74 = vector.shape_cast %73 : vector<8xf32> to vector<8x1xf32>
    %75 = tpu.reciprocal %74 {approx = true} : vector<8x1xf32> -> vector<8x1xf32>
    %76 = vector.broadcast %75 : vector<8x1xf32> to vector<8x128xf32>
    %77 = arith.mulf %72, %76 : vector<8x128xf32>
    %cst_33 = arith.constant 0.000000e+00 : f32
    %78 = vector.broadcast %cst_33 : f32 to vector<8x128xf32>
    %79 = arith.select %3, %77, %78 : vector<8x128xi1>, vector<8x128xf32>
    %80 = arith.truncf %79 : vector<8x128xf32> to vector<8x128xbf16>
    %cst_34 = arith.constant dense<0.000000e+00> : vector<8x8xf32>
    %81 = tpu.matmul %80, %80, %cst_34 {dimension_numbers = #tpu.dot_dimension_numbers<[1], [1], [0], [0], [0, 0, 1, 0], [], []>} : vector<8x128xbf16>, vector<8x128xbf16>, vector<8x8xf32> -> vector<8x8xf32>
    %c1_35 = arith.constant 1 : index
    %c0_36 = arith.constant 0 : index
    %c0_37 = arith.constant 0 : index
    %82 = vector.load %arg3[%c1_35, %c0_36, %c0_37] : memref<2x128x128xbf16, #tpu.memory_space<vmem>>, vector<1x128x128xbf16>
    %83 = vector.shape_cast %82 : vector<1x128x128xbf16> to vector<128x128xbf16>
    %cst_38 = arith.constant dense<0.000000e+00> : vector<8x128xf32>
    %84 = tpu.matmul %80, %83, %cst_38 {dimension_numbers = #tpu.dot_dimension_numbers<[1], [0], [0], [1], [0, 0, 1, 1], [], []>} : vector<8x128xbf16>, vector<128x128xbf16>, vector<8x128xf32> -> vector<8x128xf32>
    %cst_39 = arith.constant 9.000000e-05 : f32
    %85 = vector.broadcast %cst_39 : f32 to vector<8x128xf32>
    %86 = arith.mulf %85, %84 : vector<8x128xf32>
    %87 = arith.addf %59, %86 : vector<8x128xf32>
    %88 = arith.truncf %81 : vector<8x8xf32> to vector<8x8xbf16>
    %cst_40 = arith.constant dense<0.000000e+00> : vector<8x128xf32>
    %89 = tpu.matmul %88, %60, %cst_40 {dimension_numbers = #tpu.dot_dimension_numbers<[1], [0], [0], [1], [0, 0, 1, 1], [], []>} : vector<8x8xbf16>, vector<8x128xbf16>, vector<8x128xf32> -> vector<8x128xf32>
    %cst_41 = arith.constant 1.250000e-06 : f32
    %90 = vector.broadcast %cst_41 : f32 to vector<8x128xf32>
    %91 = arith.mulf %90, %89 : vector<8x128xf32>
    %92 = arith.addf %87, %91 : vector<8x128xf32>
    %93 = arith.truncf %92 : vector<8x128xf32> to vector<8x128xbf16>
    %cst_42 = arith.constant dense<0.000000e+00> : vector<8x8xf32>
    %94 = tpu.matmul %93, %93, %cst_42 {dimension_numbers = #tpu.dot_dimension_numbers<[1], [1], [0], [0], [0, 0, 1, 0], [], []>} : vector<8x128xbf16>, vector<8x128xbf16>, vector<8x8xf32> -> vector<8x8xf32>
    %95 = arith.truncf %94 : vector<8x8xf32> to vector<8x8xbf16>
    %cst_43 = arith.constant dense<0.000000e+00> : vector<8x128xf32>
    %96 = tpu.matmul %95, %93, %cst_43 {dimension_numbers = #tpu.dot_dimension_numbers<[1], [0], [0], [1], [0, 0, 1, 1], [], []>} : vector<8x8xbf16>, vector<8x128xbf16>, vector<8x128xf32> -> vector<8x128xf32>
    %cst_44 = arith.constant 1.250000e-05 : f32
    %97 = vector.broadcast %cst_44 : f32 to vector<8x128xf32>
    %98 = arith.mulf %97, %96 : vector<8x128xf32>
    %99 = arith.subf %92, %98 : vector<8x128xf32>
    %c0_45 = arith.constant 0 : index
    %c0_46 = arith.constant 0 : index
    %100 = vector.load %arg4[%c0_45, %c0_46] : memref<128x128xf32, #tpu.memory_space<vmem>>, vector<128x128xf32>
    %cst_47 = arith.constant dense<0.000000e+00> : vector<8x128xf32>
    %101 = tpu.matmul %99, %100, %cst_47 {dimension_numbers = #tpu.dot_dimension_numbers<[1], [0], [0], [1], [0, 0, 1, 1], [], []>} : vector<8x128xf32>, vector<128x128xf32>, vector<8x128xf32> -> vector<8x128xf32>
    %c0_48 = arith.constant 0 : index
    %c0_49 = arith.constant 0 : index
    %102 = vector.load %arg5[%c0_48, %c0_49] : memref<1x128xf32, #tpu.memory_space<vmem>>, vector<1x128xf32>
    %103 = vector.broadcast %102 : vector<1x128xf32> to vector<8x128xf32>
    %104 = arith.addf %101, %103 : vector<8x128xf32>
    %cst_50 = arith.constant 0.000000e+00 : f32
    %105 = vector.broadcast %cst_50 : f32 to vector<8x128xf32>
    %106 = arith.maximumf %104, %105 : vector<8x128xf32>
    %c0_51 = arith.constant 0 : index
    %c0_52 = arith.constant 0 : index
    %107 = vector.load %arg6[%c0_51, %c0_52] : memref<128x128xf32, #tpu.memory_space<vmem>>, vector<128x128xf32>
    %cst_53 = arith.constant dense<0.000000e+00> : vector<8x128xf32>
    %108 = tpu.matmul %106, %107, %cst_53 {dimension_numbers = #tpu.dot_dimension_numbers<[1], [0], [0], [1], [0, 0, 1, 1], [], []>} : vector<8x128xf32>, vector<128x128xf32>, vector<8x128xf32> -> vector<8x128xf32>
    %c0_54 = arith.constant 0 : index
    %c0_55 = arith.constant 0 : index
    %109 = vector.load %arg7[%c0_54, %c0_55] : memref<1x128xf32, #tpu.memory_space<vmem>>, vector<1x128xf32>
    %110 = vector.broadcast %109 : vector<1x128xf32> to vector<8x128xf32>
    %111 = arith.addf %108, %110 : vector<8x128xf32>
    %c0_56 = arith.constant 0 : index
    %c0_57 = arith.constant 0 : index
    %112 = vector.load %arg8[%c0_56, %c0_57] : memref<8x128xf32, #tpu.memory_space<vmem>>, vector<8x128xf32>
    tpu.vector_store %arg8[%c0_56, %c0_57], %111 {strides = array<i32>} : memref<8x128xf32, #tpu.memory_space<vmem>>, vector<8x128xf32>,
    return
  }
}

</mosaic_0001>

<llo_original>
// kernel: _forward_impl.1
$region0: #{_forward_impl.1}
  #allocation0 [shape = 'u32[]', space=smem, size = 0x4, offset = 0x4, fixed_abs, tag = 'smem constant byte address 0x4 - core index']
  #allocation1 [shape = 'u32[144,128]{1,0:T(1,128)}', space=vmem, size = 0x12000, scoped, tag = 'internal scratch']
  %s0 = inlined_call_operand.vmem [shape: f32[8,128], index: 0, kind: input, shape index: {}]
  %s1 = inlined_call_operand.hbm [shape: bf16[2,128,128], index: 1, kind: input, shape index: {}]
  %s2 = inlined_call_operand.vmem [shape: f32[2,1,128], index: 2, kind: input, shape index: {}]
  %s3 = inlined_call_operand.hbm [shape: bf16[2,128,128], index: 3, kind: input, shape index: {}]
  %s4 = inlined_call_operand.hbm [shape: f32[128,128], index: 4, kind: input, shape index: {}]
  %s5 = inlined_call_operand.vmem [shape: f32[1,128], index: 5, kind: input, shape index: {}]
  %s6 = inlined_call_operand.hbm [shape: f32[128,128], index: 6, kind: input, shape index: {}]
  %s7 = inlined_call_operand.vmem [shape: f32[1,128], index: 7, kind: input, shape index: {}]
  %s8 = inlined_call_operand.hbm [shape: f32[8,128], index: 8, kind: output, shape index: {}]
  %s9 = sld [smem:[#allocation0]]
  $region58: #{_forward_impl.1} parent=0
    _
  %s11 = ssub.s32 1, %s9
  %s12 = scalar_select 0, %s11, %s9
  $region1: #{_forward_impl.1} parent=0
    #allocation2 [shape = 'u8[65536]{0}', space=vmem, size = 0x10000, scoped, tag = 'input window, operand 1, single buffered']
    #allocation3 [shape = 's32[1]{0}', space=sflag, size = 0x4, scoped, tag = 'scoped memory for _forward_impl.1']
    #allocation4 [shape = 's32[1]{0}', space=sflag, size = 0x4, scoped, tag = 'scoped memory for _forward_impl.1']
    #allocation5 [shape = 'u8[65536]{0}', space=vmem, size = 0x10000, scoped, tag = 'input window, operand 3, single buffered']
    #allocation6 [shape = 's32[1]{0}', space=sflag, size = 0x4, scoped, tag = 'scoped memory for _forward_impl.1']
    #allocation7 [shape = 'u8[65536]{0}', space=vmem, size = 0x10000, scoped, tag = 'input window, operand 4, single buffered']
    #allocation8 [shape = 'u8[65536]{0}', space=vmem, size = 0x10000, scoped, tag = 'input window, operand 6, single buffered']
    #allocation9 [shape = 's32[1]{0}', space=sflag, size = 0x4, scoped, tag = 'scoped memory for _forward_impl.1']
    #allocation10 [shape = 'u8[4096]{0}', space=vmem, size = 0x1000, scoped, tag = 'output window, operand 0, single buffered']
    %13 = vsyncpa [#allocation3], 0
    %14 = vsyncpa [#allocation6], 0
    %15 = vsyncpa [#allocation9], 0
    %16 = vsyncpa [#allocation4], 0
    // Predicated region
    $region2: #{_forward_impl.1} parent=1 // pred_check
      _
    $region3: #{_forward_impl.1} parent=1 // pred_check_branch
      %18 = sbr.rel (0) target = $region5
    $region4: #{_forward_impl.1} parent=1 // pred_region
      _
    $region5: #{_forward_impl.1} parent=1 // pred_fallthru
      _
    // Predicated region
    $region6: #{_forward_impl.1} parent=1 // pred_check
      _
    $region7: #{_forward_impl.1} parent=1 // pred_check_branch
      %20 = sbr.rel (0) target = $region9
    $region8: #{_forward_impl.1} parent=1 // pred_region
      %s22 = ssub.s32 2048, 2048
      %23 = vsyncadd [#allocation3], %s22
      %s24 = sshll.u32 [#allocation2], 4
      %s25 = int_to_ptr.vmem [resolvable:$true] %s24
      %30 = dma.hbm_to_vmem [thread:$0]  %s1, 2048, %s25, [#allocation3], 64, 64, 4
    $region9: #{_forward_impl.1} parent=1 // pred_fallthru
      _
    // Predicated region
    $region10: #{_forward_impl.1} parent=1 // pred_check
      _
    $region11: #{_forward_impl.1} parent=1 // pred_check_branch
      %32 = sbr.rel (0) target = $region13
    $region12: #{_forward_impl.1} parent=1 // pred_region
      _
    $region13: #{_forward_impl.1} parent=1 // pred_fallthru
      _
    // Predicated region
    $region14: #{_forward_impl.1} parent=1 // pred_check
      _
    $region15: #{_forward_impl.1} parent=1 // pred_check_branch
      %34 = sbr.rel (0) target = $region17
    $region16: #{_forward_impl.1} parent=1 // pred_region
      %s36 = ssub.s32 2048, 2048
      %37 = vsyncadd [#allocation6], %s36
      %s38 = sshll.u32 [#allocation5], 4
      %s39 = int_to_ptr.vmem [resolvable:$true] %s38
      %44 = dma.hbm_to_vmem [thread:$0]  %s3, 2048, %s39, [#allocation6], 64, 64, 4
    $region17: #{_forward_impl.1} parent=1 // pred_fallthru
      _
    // Predicated region
    $region18: #{_forward_impl.1} parent=1 // pred_check
      _
    $region19: #{_forward_impl.1} parent=1 // pred_check_branch
      %46 = sbr.rel (0) target = $region21
    $region20: #{_forward_impl.1} parent=1 // pred_region
      %s48 = ssub.s32 2048, 2048
      %49 = vsyncadd [#allocation6], %s48
      %s50 = sshll.u32 [#allocation7], 4
      %s51 = int_to_ptr.vmem [resolvable:$true] %s50
      %56 = dma.hbm_to_vmem [thread:$0]  %s4, 2048, %s51, [#allocation6], 128, 128, 8
    $region21: #{_forward_impl.1} parent=1 // pred_fallthru
      _
    // Predicated region
    $region22: #{_forward_impl.1} parent=1 // pred_check
      _
    $region23: #{_forward_impl.1} parent=1 // pred_check_branch
      %58 = sbr.rel (0) target = $region25
    $region24: #{_forward_impl.1} parent=1 // pred_region
      _
    $region25: #{_forward_impl.1} parent=1 // pred_fallthru
      _
    // Predicated region
    $region26: #{_forward_impl.1} parent=1 // pred_check
      _
    $region27: #{_forward_impl.1} parent=1 // pred_check_branch
      %60 = sbr.rel (0) target = $region29
    $region28: #{_forward_impl.1} parent=1 // pred_region
      %s62 = ssub.s32 2048, 2048
      %63 = vsyncadd [#allocation9], %s62
      %s64 = sshll.u32 [#allocation8], 4
      %s65 = int_to_ptr.vmem [resolvable:$true] %s64
      %70 = dma.hbm_to_vmem [thread:$0]  %s6, 2048, %s65, [#allocation9], 128, 128, 8
    $region29: #{_forward_impl.1} parent=1 // pred_fallthru
      _
    // Predicated region
    $region30: #{_forward_impl.1} parent=1 // pred_check
      _
    $region31: #{_forward_impl.1} parent=1 // pred_check_branch
      %72 = sbr.rel (0) target = $region33
    $region32: #{_forward_impl.1} parent=1 // pred_region
      _
    $region33: #{_forward_impl.1} parent=1 // pred_fallthru
      _
    // Predicated region
    $region34: #{_forward_impl.1} parent=1 // pred_check
      _
    $region35: #{_forward_impl.1} parent=1 // pred_check_branch
      %74 = sbr.rel (0) target = $region37
    $region36: #{_forward_impl.1} parent=1 // pred_region
      %75 = dma.done [#allocation3], 2048
    $region37: #{_forward_impl.1} parent=1 // pred_fallthru
      _
    // Predicated region
    $region38: #{_forward_impl.1} parent=1 // pred_check
      _
    $region39: #{_forward_impl.1} parent=1 // pred_check_branch
      %77 = sbr.rel (0) target = $region41
    $region40: #{_forward_impl.1} parent=1 // pred_region
      %78 = dma.done [#allocation6], 2048
    $region41: #{_forward_impl.1} parent=1 // pred_fallthru
      _
    // Predicated region
    $region42: #{_forward_impl.1} parent=1 // pred_check
      _
    $region43: #{_forward_impl.1} parent=1 // pred_check_branch
      %80 = sbr.rel (0) target = $region45
    $region44: #{_forward_impl.1} parent=1 // pred_region
      %81 = dma.done [#allocation6], 2048
    $region45: #{_forward_impl.1} parent=1 // pred_fallthru
      _
    // Predicated region
    $region46: #{_forward_impl.1} parent=1 // pred_check
      _
    $region47: #{_forward_impl.1} parent=1 // pred_check_branch
      %83 = sbr.rel (0) target = $region49
    $region48: #{_forward_impl.1} parent=1 // pred_region
      %84 = dma.done [#allocation9], 2048
    $region49: #{_forward_impl.1} parent=1 // pred_fallthru
      _
    %v86 = vld [vmem:[%s0] sm:$0xff]
    %v87 = vlaneseq
    %v88 = vshrl.u32 %v87, 7
    %vm89 = vcmp.lt.s32.totalorder %v88, 8
    %v90 = vmul.f32 %v86, %v86
    %91 = vadd.xlane.f32.xlu0 %v90
    %v92 = vpop.xlane.xlu0 %91
    %v93 = vmax.f32 %v92, 1e-30
    %v94 = vrsqrt.pop %v93
    %v95 = vmul.f32 %v86, %v94
    %v96 = vpack.c.bf16 %v95, %v95
    %v97 = vld [vmem:[#allocation2] sm:$0xf]
    %v98 = vld [vmem:[#allocation2 + $0x4] sm:$0xf]
    %v99 = vld [vmem:[#allocation2 + $0x8] sm:$0xf]
    %v100 = vld [vmem:[#allocation2 + $0xc] sm:$0xf]
    %v101 = vld [vmem:[#allocation2 + $0x10] sm:$0xf]
    %v102 = vld [vmem:[#allocation2 + $0x14] sm:$0xf]
    %v103 = vld [vmem:[#allocation2 + $0x18] sm:$0xf]
    %v104 = vld [vmem:[#allocation2 + $0x1c] sm:$0xf]
    %v105 = vld [vmem:[#allocation2 + $0x20] sm:$0xf]
    %v106 = vld [vmem:[#allocation2 + $0x24] sm:$0xf]
    %v107 = vld [vmem:[#allocation2 + $0x28] sm:$0xf]
    %v108 = vld [vmem:[#allocation2 + $0x2c] sm:$0xf]
    %v109 = vld [vmem:[#allocation2 + $0x30] sm:$0xf]
    %v110 = vld [vmem:[#allocation2 + $0x34] sm:$0xf]
    %v111 = vld [vmem:[#allocation2 + $0x38] sm:$0xf]
    %v112 = vld [vmem:[#allocation2 + $0x3c] sm:$0xf]
    %v113 = vld [vmem:[%s2] sm:$0x1]
    %v115 = vlaneseq
    %v116 = vshrl.u32 %v115, 7
    %v117 = vsub.s32 0, %v116
    %v118 = vrot.slane %v113, %v117
    %v136 = vunpack.c.l.b16 %v97
    %v137 = vunpack.c.l.b16 %v98
    %v138 = vunpack.c.l.b16 %v99
    %v139 = vunpack.c.l.b16 %v100
    %v140 = vunpack.c.l.b16 %v101
    %v141 = vunpack.c.l.b16 %v102
    %v142 = vunpack.c.l.b16 %v103
    %v143 = vunpack.c.l.b16 %v104
    %v144 = vunpack.c.l.b16 %v105
    %v145 = vunpack.c.l.b16 %v106
    %v146 = vunpack.c.l.b16 %v107
    %v147 = vunpack.c.l.b16 %v108
    %v148 = vunpack.c.l.b16 %v109
    %v149 = vunpack.c.l.b16 %v110
    %v150 = vunpack.c.l.b16 %v111
    %v151 = vunpack.c.l.b16 %v112
    %v152 = vpack.c.b16 %v137, %v136
    %v153 = vpack.c.b16 %v139, %v138
    %v154 = vpack.c.b16 %v141, %v140
    %v155 = vpack.c.b16 %v143, %v142
    %v156 = vpack.c.b16 %v145, %v144
    %v157 = vpack.c.b16 %v147, %v146
    %v158 = vpack.c.b16 %v149, %v148
    %v159 = vpack.c.b16 %v151, %v150
    %168 = vmatprep.subr.bf16.mxu0 0
    %169 = vmatpush1.bf16.msra.mxu0 %v152
    %170 = vmatprep.subr.bf16.mxu0 0
    %171 = vmatpush1.bf16.msra.mxu0 %v153
    %172 = vmatprep.subr.bf16.mxu0 0
    %173 = vmatpush1.bf16.msra.mxu0 %v154
    %174 = vmatprep.subr.bf16.mxu0 0
    %175 = vmatpush1.bf16.msra.mxu0 %v155
    %176 = vmatprep.subr.bf16.mxu0 0
    %177 = vmatpush1.bf16.msra.mxu0 %v156
    %178 = vmatprep.subr.bf16.mxu0 0
    %179 = vmatpush1.bf16.msra.mxu0 %v157
    %180 = vmatprep.subr.bf16.mxu0 0
    %181 = vmatpush1.bf16.msra.mxu0 %v158
    %182 = vmatprep.subr.bf16.mxu0 0
    %183 = vmatpush1.bf16.msra.mxu0 %v159
    %184 = vmatprep.subr.bf16.mxu0 0
    %185 = vmatpush1.bf16.msra.mxu0 0
    %186 = vmatprep.subr.bf16.mxu0 0
    %187 = vmatpush1.bf16.msra.mxu0 0
    %188 = vmatprep.subr.bf16.mxu0 0
    %189 = vmatpush1.bf16.msra.mxu0 0
    %190 = vmatprep.subr.bf16.mxu0 0
    %191 = vmatpush1.bf16.msra.mxu0 0
    %192 = vmatprep.subr.bf16.mxu0 0
    %193 = vmatpush1.bf16.msra.mxu0 0
    %194 = vmatprep.subr.bf16.mxu0 0
    %195 = vmatpush1.bf16.msra.mxu0 0
    %196 = vmatprep.subr.bf16.mxu0 0
    %197 = vmatpush1.bf16.msra.mxu0 0
    %198 = vmatprep.subr.bf16.mxu0 0
    %199 = vmatpush1.bf16.msra.mxu0 0
    %200 = vmatprep.mubr.bf16.mxu0 0
    %201 = vmatmul.mubr.bf16.gmra.mrb[0].mxu0 %v96
    %v202 = vpop.f32.mrb[0].mxu0
    %v203 = vadd.f32 %v118, %v202
    %v204 = vpop.f32.mrb[0].mxu0
    %v205 = vpop.f32.mrb[0].mxu0
    %v206 = vpop.f32.mrb[0].mxu0
    %207 = vdwg.mxu0
    %208 = vmax.xlane.f32.xlu0 %v203
    %v209 = vpop.xlane.xlu0 %208
    %v210 = vsub.f32 %v203, %v209
    %v211 = vmul.f32 %v210, 1.442695
    %v212 = vpow.pop %v211
    %213 = vadd.xlane.f32.xlu0 %v212
    %v214 = vpop.xlane.xlu0 %213
    %v215 = vrcp.pop %v214
    %v216 = vmul.f32 %v212, %v215
    %v217 = vsel %vm89, %v216, 0.0
    %v218 = vpack.c.bf16 %v217, %v217
    %219 = vmatprep.subr.bf16.mxu0 0
    %220 = vmatpush1.bf16.xpose.msra.mxu0 %v218
    %221 = vmatprep.subr.bf16.mxu0 0
    %222 = vmatpush1.bf16.xpose.msra.mxu0 0
    %223 = vmatprep.subr.bf16.mxu0 0
    %224 = vmatpush1.bf16.xpose.msra.mxu0 0
    %225 = vmatprep.subr.bf16.mxu0 0
    %226 = vmatpush1.bf16.xpose.msra.mxu0 0
    %227 = vmatprep.subr.bf16.mxu0 0
    %228 = vmatpush1.bf16.xpose.msra.mxu0 0
    %229 = vmatprep.subr.bf16.mxu0 0
    %230 = vmatpush1.bf16.xpose.msra.mxu0 0
    %231 = vmatprep.subr.bf16.mxu0 0
    %232 = vmatpush1.bf16.xpose.msra.mxu0 0
    %233 = vmatprep.subr.bf16.mxu0 0
    %234 = vmatpush1.bf16.xpose.msra.mxu0 0
    %235 = vmatprep.subr.bf16.mxu0 0
    %236 = vmatpush1.bf16.xpose.msra.mxu0 0
    %237 = vmatprep.subr.bf16.mxu0 0
    %238 = vmatpush1.bf16.xpose.msra.mxu0 0
    %239 = vmatprep.subr.bf16.mxu0 0
    %240 = vmatpush1.bf16.xpose.msra.mxu0 0
    %241 = vmatprep.subr.bf16.mxu0 0
    %242 = vmatpush1.bf16.xpose.msra.mxu0 0
    %243 = vmatprep.subr.bf16.mxu0 0
    %244 = vmatpush1.bf16.xpose.msra.mxu0 0
    %245 = vmatprep.subr.bf16.mxu0 0
    %246 = vmatpush1.bf16.xpose.msra.mxu0 0
    %247 = vmatprep.subr.bf16.mxu0 0
    %248 = vmatpush1.bf16.xpose.msra.mxu0 0
    %249 = vmatprep.subr.bf16.mxu0 0
    %250 = vmatpush1.bf16.xpose.msra.mxu0 0
    %251 = vmatprep.mubr.bf16.mxu0 0
    %252 = vmatmul.mubr.bf16.gmra.mrb[0].mxu0 %v218
    %v253 = vpop.f32.mrb[0].mxu0
    %v254 = vadd.f32 0.0, %v253
    %v255 = vpop.f32.mrb[0].mxu0
    %v256 = vpop.f32.mrb[0].mxu0
    %v257 = vpop.f32.mrb[0].mxu0
    %258 = vdwg.mxu0
    %v259 = vld [vmem:[#allocation5] sm:$0xf]
    %v260 = vld [vmem:[#allocation5 + $0x4] sm:$0xf]
    %v261 = vld [vmem:[#allocation5 + $0x8] sm:$0xf]
    %v262 = vld [vmem:[#allocation5 + $0xc] sm:$0xf]
    %v263 = vld [vmem:[#allocation5 + $0x10] sm:$0xf]
    %v264 = vld [vmem:[#allocation5 + $0x14] sm:$0xf]
    %v265 = vld [vmem:[#allocation5 + $0x18] sm:$0xf]
    %v266 = vld [vmem:[#allocation5 + $0x1c] sm:$0xf]
    %v267 = vld [vmem:[#allocation5 + $0x20] sm:$0xf]
    %v268 = vld [vmem:[#allocation5 + $0x24] sm:$0xf]
    %v269 = vld [vmem:[#allocation5 + $0x28] sm:$0xf]
    %v270 = vld [vmem:[#allocation5 + $0x2c] sm:$0xf]
    %v271 = vld [vmem:[#allocation5 + $0x30] sm:$0xf]
    %v272 = vld [vmem:[#allocation5 + $0x34] sm:$0xf]
    %v273 = vld [vmem:[#allocation5 + $0x38] sm:$0xf]
    %v274 = vld [vmem:[#allocation5 + $0x3c] sm:$0xf]
    %v291 = vunpack.c.l.b16 %v259
    %v292 = vunpack.c.l.b16 %v260
    %v293 = vunpack.c.l.b16 %v261
    %v294 = vunpack.c.l.b16 %v262
    %v295 = vunpack.c.l.b16 %v263
    %v296 = vunpack.c.l.b16 %v264
    %v297 = vunpack.c.l.b16 %v265
    %v298 = vunpack.c.l.b16 %v266
    %v299 = vunpack.c.l.b16 %v267
    %v300 = vunpack.c.l.b16 %v268
    %v301 = vunpack.c.l.b16 %v269
    %v302 = vunpack.c.l.b16 %v270
    %v303 = vunpack.c.l.b16 %v271
    %v304 = vunpack.c.l.b16 %v272
    %v305 = vunpack.c.l.b16 %v273
    %v306 = vunpack.c.l.b16 %v274
    %v307 = vpack.c.b16 %v292, %v291
    %v308 = vpack.c.b16 %v294, %v293
    %v309 = vpack.c.b16 %v296, %v295
    %v310 = vpack.c.b16 %v298, %v297
    %v311 = vpack.c.b16 %v300, %v299
    %v312 = vpack.c.b16 %v302, %v301
    %v313 = vpack.c.b16 %v304, %v303
    %v314 = vpack.c.b16 %v306, %v305
    %323 = vmatprep.subr.bf16.mxu0 0
    %324 = vmatpush1.bf16.msra.mxu0 %v307
    %325 = vmatprep.subr.bf16.mxu0 0
    %326 = vmatpush1.bf16.msra.mxu0 %v308
    %327 = vmatprep.subr.bf16.mxu0 0
    %328 = vmatpush1.bf16.msra.mxu0 %v309
    %329 = vmatprep.subr.bf16.mxu0 0
    %330 = vmatpush1.bf16.msra.mxu0 %v310
    %331 = vmatprep.subr.bf16.mxu0 0
    %332 = vmatpush1.bf16.msra.mxu0 %v311
    %333 = vmatprep.subr.bf16.mxu0 0
    %334 = vmatpush1.bf16.msra.mxu0 %v312
    %335 = vmatprep.subr.bf16.mxu0 0
    %336 = vmatpush1.bf16.msra.mxu0 %v313
    %337 = vmatprep.subr.bf16.mxu0 0
    %338 = vmatpush1.bf16.msra.mxu0 %v314
    %339 = vmatprep.subr.bf16.mxu0 0
    %340 = vmatpush1.bf16.msra.mxu0 0
    %341 = vmatprep.subr.bf16.mxu0 0
    %342 = vmatpush1.bf16.msra.mxu0 0
    %343 = vmatprep.subr.bf16.mxu0 0
    %344 = vmatpush1.bf16.msra.mxu0 0
    %345 = vmatprep.subr.bf16.mxu0 0
    %346 = vmatpush1.bf16.msra.mxu0 0
    %347 = vmatprep.subr.bf16.mxu0 0
    %348 = vmatpush1.bf16.msra.mxu0 0
    %349 = vmatprep.subr.bf16.mxu0 0
    %350 = vmatpush1.bf16.msra.mxu0 0
    %351 = vmatprep.subr.bf16.mxu0 0
    %352 = vmatpush1.bf16.msra.mxu0 0
    %353 = vmatprep.subr.bf16.mxu0 0
    %354 = vmatpush1.bf16.msra.mxu0 0
    %355 = vmatprep.mubr.bf16.mxu0 0
    %356 = vmatmul.mubr.bf16.gmra.mrb[0].mxu0 %v218
    %v357 = vpop.f32.mrb[0].mxu0
    %v358 = vadd.f32 0.0, %v357
    %v359 = vpop.f32.mrb[0].mxu0
    %v360 = vpop.f32.mrb[0].mxu0
    %v361 = vpop.f32.mrb[0].mxu0
    %362 = vdwg.mxu0
    %v363 = vmul.f32 %v358, 9e-05
    %v364 = vadd.f32 %v95, %v363
    %v365 = vpack.c.bf16 %v254, %v254
    %vm366 = vcmask 64512
    %v368 = vsel %vm366, %v365, 0
    %vm370 = vcmask 1043456
    %v372 = vsel %vm370, %v96, 0
    %374 = vmatprep.subr.bf16.mxu0 0
    %375 = vmatpush1.bf16.msra.mxu0 %v372
    %376 = vmatprep.subr.bf16.mxu0 0
    %377 = vmatpush1.bf16.msra.mxu0 0
    %378 = vmatprep.subr.bf16.mxu0 0
    %379 = vmatpush1.bf16.msra.mxu0 0
    %380 = vmatprep.subr.bf16.mxu0 0
    %381 = vmatpush1.bf16.msra.mxu0 0
    %382 = vmatprep.subr.bf16.mxu0 0
    %383 = vmatpush1.bf16.msra.mxu0 0
    %384 = vmatprep.subr.bf16.mxu0 0
    %385 = vmatpush1.bf16.msra.mxu0 0
    %386 = vmatprep.subr.bf16.mxu0 0
    %387 = vmatpush1.bf16.msra.mxu0 0
    %388 = vmatprep.subr.bf16.mxu0 0
    %389 = vmatpush1.bf16.msra.mxu0 0
    %390 = vmatprep.subr.bf16.mxu0 0
    %391 = vmatpush1.bf16.msra.mxu0 0
    %392 = vmatprep.subr.bf16.mxu0 0
    %393 = vmatpush1.bf16.msra.mxu0 0
    %394 = vmatprep.subr.bf16.mxu0 0
    %395 = vmatpush1.bf16.msra.mxu0 0
    %396 = vmatprep.subr.bf16.mxu0 0
    %397 = vmatpush1.bf16.msra.mxu0 0
    %398 = vmatprep.subr.bf16.mxu0 0
    %399 = vmatpush1.bf16.msra.mxu0 0
    %400 = vmatprep.subr.bf16.mxu0 0
    %401 = vmatpush1.bf16.msra.mxu0 0
    %402 = vmatprep.subr.bf16.mxu0 0
    %403 = vmatpush1.bf16.msra.mxu0 0
    %404 = vmatprep.subr.bf16.mxu0 0
    %405 = vmatpush1.bf16.msra.mxu0 0
    %406 = vmatprep.mubr.bf16.mxu0 0
    %407 = vmatmul.mubr.bf16.gmra.mrb[0].mxu0 %v368
    %v408 = vpop.f32.mrb[0].mxu0
    %v409 = vadd.f32 0.0, %v408
    %v410 = vpop.f32.mrb[0].mxu0
    %v411 = vpop.f32.mrb[0].mxu0
    %v412 = vpop.f32.mrb[0].mxu0
    %413 = vdwg.mxu0
    %v414 = vmul.f32 %v409, 1.25e-06
    %v415 = vadd.f32 %v364, %v414
    %v416 = vpack.c.bf16 %v415, %v415
    %417 = vmatprep.subr.bf16.mxu0 0
    %418 = vmatpush1.bf16.xpose.msra.mxu0 %v416
    %419 = vmatprep.subr.bf16.mxu0 0
    %420 = vmatpush1.bf16.xpose.msra.mxu0 0
    %421 = vmatprep.subr.bf16.mxu0 0
    %422 = vmatpush1.bf16.xpose.msra.mxu0 0
    %423 = vmatprep.subr.bf16.mxu0 0
    %424 = vmatpush1.bf16.xpose.msra.mxu0 0
    %425 = vmatprep.subr.bf16.mxu0 0
    %426 = vmatpush1.bf16.xpose.msra.mxu0 0
    %427 = vmatprep.subr.bf16.mxu0 0
    %428 = vmatpush1.bf16.xpose.msra.mxu0 0
    %429 = vmatprep.subr.bf16.mxu0 0
    %430 = vmatpush1.bf16.xpose.msra.mxu0 0
    %431 = vmatprep.subr.bf16.mxu0 0
    %432 = vmatpush1.bf16.xpose.msra.mxu0 0
    %433 = vmatprep.subr.bf16.mxu0 0
    %434 = vmatpush1.bf16.xpose.msra.mxu0 0
    %435 = vmatprep.subr.bf16.mxu0 0
    %436 = vmatpush1.bf16.xpose.msra.mxu0 0
    %437 = vmatprep.subr.bf16.mxu0 0
    %438 = vmatpush1.bf16.xpose.msra.mxu0 0
    %439 = vmatprep.subr.bf16.mxu0 0
    %440 = vmatpush1.bf16.xpose.msra.mxu0 0
    %441 = vmatprep.subr.bf16.mxu0 0
    %442 = vmatpush1.bf16.xpose.msra.mxu0 0
    %443 = vmatprep.subr.bf16.mxu0 0
    %444 = vmatpush1.bf16.xpose.msra.mxu0 0
    %445 = vmatprep.subr.bf16.mxu0 0
    %446 = vmatpush1.bf16.xpose.msra.mxu0 0
    %447 = vmatprep.subr.bf16.mxu0 0
    %448 = vmatpush1.bf16.xpose.msra.mxu0 0
    %449 = vmatprep.mubr.bf16.mxu0 0
    %450 = vmatmul.mubr.bf16.gmra.mrb[0].mxu0 %v416
    %v451 = vpop.f32.mrb[0].mxu0
    %v452 = vadd.f32 0.0, %v451
    %v453 = vpop.f32.mrb[0].mxu0
    %v454 = vpop.f32.mrb[0].mxu0
    %v455 = vpop.f32.mrb[0].mxu0
    %456 = vdwg.mxu0
    %v457 = vpack.c.bf16 %v452, %v452
    %v459 = vsel %vm366, %v457, 0
    %v462 = vsel %vm370, %v416, 0
    %464 = vmatprep.subr.bf16.mxu0 0
    %465 = vmatpush1.bf16.msra.mxu0 %v462
    %466 = vmatprep.subr.bf16.mxu0 0
    %467 = vmatpush1.bf16.msra.mxu0 0
    %468 = vmatprep.subr.bf16.mxu0 0
    %469 = vmatpush1.bf16.msra.mxu0 0
    %470 = vmatprep.subr.bf16.mxu0 0
    %471 = vmatpush1.bf16.msra.mxu0 0
    %472 = vmatprep.subr.bf16.mxu0 0
    %473 = vmatpush1.bf16.msra.mxu0 0
    %474 = vmatprep.subr.bf16.mxu0 0
    %475 = vmatpush1.bf16.msra.mxu0 0
    %476 = vmatprep.subr.bf16.mxu0 0
    %477 = vmatpush1.bf16.msra.mxu0 0
    %478 = vmatprep.subr.bf16.mxu0 0
    %479 = vmatpush1.bf16.msra.mxu0 0
    %480 = vmatprep.subr.bf16.mxu0 0
    %481 = vmatpush1.bf16.msra.mxu0 0
    %482 = vmatprep.subr.bf16.mxu0 0
    %483 = vmatpush1.bf16.msra.mxu0 0
    %484 = vmatprep.subr.bf16.mxu0 0
    %485 = vmatpush1.bf16.msra.mxu0 0
    %486 = vmatprep.subr.bf16.mxu0 0
    %487 = vmatpush1.bf16.msra.mxu0 0
    %488 = vmatprep.subr.bf16.mxu0 0
    %489 = vmatpush1.bf16.msra.mxu0 0
    %490 = vmatprep.subr.bf16.mxu0 0
    %491 = vmatpush1.bf16.msra.mxu0 0
    %492 = vmatprep.subr.bf16.mxu0 0
    %493 = vmatpush1.bf16.msra.mxu0 0
    %494 = vmatprep.subr.bf16.mxu0 0
    %495 = vmatpush1.bf16.msra.mxu0 0
    %496 = vmatprep.mubr.bf16.mxu0 0
    %497 = vmatmul.mubr.bf16.gmra.mrb[0].mxu0 %v459
    %v498 = vpop.f32.mrb[0].mxu0
    %v499 = vadd.f32 0.0, %v498
    %v500 = vpop.f32.mrb[0].mxu0
    %v501 = vpop.f32.mrb[0].mxu0
    %v502 = vpop.f32.mrb[0].mxu0
    %503 = vdwg.mxu0
    %v504 = vmul.f32 %v499, 1.25e-05
    %v505 = vsub.f32 %v415, %v504
    %v506 = vmul.f32 %v505, %v505
    %507 = vadd.xlane.f32.xlu0 %v506
    %v508 = vpop.xlane.xlu0 %507
    %v509 = vmax.f32 %v508, 1e-30
    %v510 = vrsqrt.pop %v509
    %v511 = vmul.f32 %v505, %v510
    %v512 = vpack.c.bf16 %v511, %v511
    %s513 = scalar_lea.vmem [#allocation2], 64
    %v514 = vld [vmem:[%s513] sm:$0xf]
    %v515 = vld [vmem:[%s513 + $0x4] sm:$0xf]
    %v516 = vld [vmem:[%s513 + $0x8] sm:$0xf]
    %v517 = vld [vmem:[%s513 + $0xc] sm:$0xf]
    %v518 = vld [vmem:[%s513 + $0x10] sm:$0xf]
    %v519 = vld [vmem:[%s513 + $0x14] sm:$0xf]
    %v520 = vld [vmem:[%s513 + $0x18] sm:$0xf]
    %v521 = vld [vmem:[%s513 + $0x1c] sm:$0xf]
    %v522 = vld [vmem:[%s513 + $0x20] sm:$0xf]
    %v523 = vld [vmem:[%s513 + $0x24] sm:$0xf]
    %v524 = vld [vmem:[%s513 + $0x28] sm:$0xf]
    %v525 = vld [vmem:[%s513 + $0x2c] sm:$0xf]
    %v526 = vld [vmem:[%s513 + $0x30] sm:$0xf]
    %v527 = vld [vmem:[%s513 + $0x34] sm:$0xf]
    %v528 = vld [vmem:[%s513 + $0x38] sm:$0xf]
    %v529 = vld [vmem:[%s513 + $0x3c] sm:$0xf]
    %s530 = scalar_lea.vmem %s2, 1
    %v531 = vld [vmem:[%s530] sm:$0x1]
    %v533 = vlaneseq
    %v534 = vshrl.u32 %v533, 7
    %v535 = vsub.s32 0, %v534
    %v536 = vrot.slane %v531, %v535
    %v554 = vunpack.c.l.b16 %v514
    %v555 = vunpack.c.l.b16 %v515
    %v556 = vunpack.c.l.b16 %v516
    %v557 = vunpack.c.l.b16 %v517
    %v558 = vunpack.c.l.b16 %v518
    %v559 = vunpack.c.l.b16 %v519
    %v560 = vunpack.c.l.b16 %v520
    %v561 = vunpack.c.l.b16 %v521
    %v562 = vunpack.c.l.b16 %v522
    %v563 = vunpack.c.l.b16 %v523
    %v564 = vunpack.c.l.b16 %v524
    %v565 = vunpack.c.l.b16 %v525
    %v566 = vunpack.c.l.b16 %v526
    %v567 = vunpack.c.l.b16 %v527
    %v568 = vunpack.c.l.b16 %v528
    %v569 = vunpack.c.l.b16 %v529
    %v570 = vpack.c.b16 %v555, %v554
    %v571 = vpack.c.b16 %v557, %v556
    %v572 = vpack.c.b16 %v559, %v558
    %v573 = vpack.c.b16 %v561, %v560
    %v574 = vpack.c.b16 %v563, %v562
    %v575 = vpack.c.b16 %v565, %v564
    %v576 = vpack.c.b16 %v567, %v566
    %v577 = vpack.c.b16 %v569, %v568
    %586 = vmatprep.subr.bf16.mxu0 0
    %587 = vmatpush1.bf16.msra.mxu0 %v570
    %588 = vmatprep.subr.bf16.mxu0 0
    %589 = vmatpush1.bf16.msra.mxu0 %v571
    %590 = vmatprep.subr.bf16.mxu0 0
    %591 = vmatpush1.bf16.msra.mxu0 %v572
    %592 = vmatprep.subr.bf16.mxu0 0
    %593 = vmatpush1.bf16.msra.mxu0 %v573
    %594 = vmatprep.subr.bf16.mxu0 0
    %595 = vmatpush1.bf16.msra.mxu0 %v574
    %596 = vmatprep.subr.bf16.mxu0 0
    %597 = vmatpush1.bf16.msra.mxu0 %v575
    %598 = vmatprep.subr.bf16.mxu0 0
    %599 = vmatpush1.bf16.msra.mxu0 %v576
    %600 = vmatprep.subr.bf16.mxu0 0
    %601 = vmatpush1.bf16.msra.mxu0 %v577
    %602 = vmatprep.subr.bf16.mxu0 0
    %603 = vmatpush1.bf16.msra.mxu0 0
    %604 = vmatprep.subr.bf16.mxu0 0
    %605 = vmatpush1.bf16.msra.mxu0 0
    %606 = vmatprep.subr.bf16.mxu0 0
    %607 = vmatpush1.bf16.msra.mxu0 0
    %608 = vmatprep.subr.bf16.mxu0 0
    %609 = vmatpush1.bf16.msra.mxu0 0
    %610 = vmatprep.subr.bf16.mxu0 0
    %611 = vmatpush1.bf16.msra.mxu0 0
    %612 = vmatprep.subr.bf16.mxu0 0
    %613 = vmatpush1.bf16.msra.mxu0 0
    %614 = vmatprep.subr.bf16.mxu0 0
    %615 = vmatpush1.bf16.msra.mxu0 0
    %616 = vmatprep.subr.bf16.mxu0 0
    %617 = vmatpush1.bf16.msra.mxu0 0
    %618 = vmatprep.mubr.bf16.mxu0 0
    %619 = vmatmul.mubr.bf16.gmra.mrb[0].mxu0 %v512
    %v620 = vpop.f32.mrb[0].mxu0
    %v621 = vadd.f32 %v536, %v620
    %v622 = vpop.f32.mrb[0].mxu0
    %v623 = vpop.f32.mrb[0].mxu0
    %v624 = vpop.f32.mrb[0].mxu0
    %625 = vdwg.mxu0
    %626 = vmax.xlane.f32.xlu0 %v621
    %v627 = vpop.xlane.xlu0 %626
    %v628 = vsub.f32 %v621, %v627
    %v629 = vmul.f32 %v628, 1.442695
    %v630 = vpow.pop %v629
    %631 = vadd.xlane.f32.xlu0 %v630
    %v632 = vpop.xlane.xlu0 %631
    %v633 = vrcp.pop %v632
    %v634 = vmul.f32 %v630, %v633
    %v635 = vsel %vm89, %v634, 0.0
    %v636 = vpack.c.bf16 %v635, %v635
    %637 = vmatprep.subr.bf16.mxu0 0
    %638 = vmatpush1.bf16.xpose.msra.mxu0 %v636
    %639 = vmatprep.subr.bf16.mxu0 0
    %640 = vmatpush1.bf16.xpose.msra.mxu0 0
    %641 = vmatprep.subr.bf16.mxu0 0
    %642 = vmatpush1.bf16.xpose.msra.mxu0 0
    %643 = vmatprep.subr.bf16.mxu0 0
    %644 = vmatpush1.bf16.xpose.msra.mxu0 0
    %645 = vmatprep.subr.bf16.mxu0 0
    %646 = vmatpush1.bf16.xpose.msra.mxu0 0
    %647 = vmatprep.subr.bf16.mxu0 0
    %648 = vmatpush1.bf16.xpose.msra.mxu0 0
    %649 = vmatprep.subr.bf16.mxu0 0
    %650 = vmatpush1.bf16.xpose.msra.mxu0 0
    %651 = vmatprep.subr.bf16.mxu0 0
    %652 = vmatpush1.bf16.xpose.msra.mxu0 0
    %653 = vmatprep.subr.bf16.mxu0 0
    %654 = vmatpush1.bf16.xpose.msra.mxu0 0
    %655 = vmatprep.subr.bf16.mxu0 0
    %656 = vmatpush1.bf16.xpose.msra.mxu0 0
    %657 = vmatprep.subr.bf16.mxu0 0
    %658 = vmatpush1.bf16.xpose.msra.mxu0 0
    %659 = vmatprep.subr.bf16.mxu0 0
    %660 = vmatpush1.bf16.xpose.msra.mxu0 0
    %661 = vmatprep.subr.bf16.mxu0 0
    %662 = vmatpush1.bf16.xpose.msra.mxu0 0
    %663 = vmatprep.subr.bf16.mxu0 0
    %664 = vmatpush1.bf16.xpose.msra.mxu0 0
    %665 = vmatprep.subr.bf16.mxu0 0
    %666 = vmatpush1.bf16.xpose.msra.mxu0 0
    %667 = vmatprep.subr.bf16.mxu0 0
    %668 = vmatpush1.bf16.xpose.msra.mxu0 0
    %669 = vmatprep.mubr.bf16.mxu0 0
    %670 = vmatmul.mubr.bf16.gmra.mrb[0].mxu0 %v636
    %v671 = vpop.f32.mrb[0].mxu0
    %v672 = vadd.f32 0.0, %v671
    %v673 = vpop.f32.mrb[0].mxu0
    %v674 = vpop.f32.mrb[0].mxu0
    %v675 = vpop.f32.mrb[0].mxu0
    %676 = vdwg.mxu0
    %s677 = scalar_lea.vmem [#allocation5], 64
    %v678 = vld [vmem:[%s677] sm:$0xf]
    %v679 = vld [vmem:[%s677 + $0x4] sm:$0xf]
    %v680 = vld [vmem:[%s677 + $0x8] sm:$0xf]
    %v681 = vld [vmem:[%s677 + $0xc] sm:$0xf]
    %v682 = vld [vmem:[%s677 + $0x10] sm:$0xf]
    %v683 = vld [vmem:[%s677 + $0x14] sm:$0xf]
    %v684 = vld [vmem:[%s677 + $0x18] sm:$0xf]
    %v685 = vld [vmem:[%s677 + $0x1c] sm:$0xf]
    %v686 = vld [vmem:[%s677 + $0x20] sm:$0xf]
    %v687 = vld [vmem:[%s677 + $0x24] sm:$0xf]
    %v688 = vld [vmem:[%s677 + $0x28] sm:$0xf]
    %v689 = vld [vmem:[%s677 + $0x2c] sm:$0xf]
    %v690 = vld [vmem:[%s677 + $0x30] sm:$0xf]
    %v691 = vld [vmem:[%s677 + $0x34] sm:$0xf]
    %v692 = vld [vmem:[%s677 + $0x38] sm:$0xf]
    %v693 = vld [vmem:[%s677 + $0x3c] sm:$0xf]
    %v710 = vunpack.c.l.b16 %v678
    %v711 = vunpack.c.l.b16 %v679
    %v712 = vunpack.c.l.b16 %v680
    %v713 = vunpack.c.l.b16 %v681
    %v714 = vunpack.c.l.b16 %v682
    %v715 = vunpack.c.l.b16 %v683
    %v716 = vunpack.c.l.b16 %v684
    %v717 = vunpack.c.l.b16 %v685
    %v718 = vunpack.c.l.b16 %v686
    %v719 = vunpack.c.l.b16 %v687
    %v720 = vunpack.c.l.b16 %v688
    %v721 = vunpack.c.l.b16 %v689
    %v722 = vunpack.c.l.b16 %v690
    %v723 = vunpack.c.l.b16 %v691
    %v724 = vunpack.c.l.b16 %v692
    %v725 = vunpack.c.l.b16 %v693
    %v726 = vpack.c.b16 %v711, %v710
    %v727 = vpack.c.b16 %v713, %v712
    %v728 = vpack.c.b16 %v715, %v714
    %v729 = vpack.c.b16 %v717, %v716
    %v730 = vpack.c.b16 %v719, %v718
    %v731 = vpack.c.b16 %v721, %v720
    %v732 = vpack.c.b16 %v723, %v722
    %v733 = vpack.c.b16 %v725, %v724
    %742 = vmatprep.subr.bf16.mxu0 0
    %743 = vmatpush1.bf16.msra.mxu0 %v726
    %744 = vmatprep.subr.bf16.mxu0 0
    %745 = vmatpush1.bf16.msra.mxu0 %v727
    %746 = vmatprep.subr.bf16.mxu0 0
    %747 = vmatpush1.bf16.msra.mxu0 %v728
    %748 = vmatprep.subr.bf16.mxu0 0
    %749 = vmatpush1.bf16.msra.mxu0 %v729
    %750 = vmatprep.subr.bf16.mxu0 0
    %751 = vmatpush1.bf16.msra.mxu0 %v730
    %752 = vmatprep.subr.bf16.mxu0 0
    %753 = vmatpush1.bf16.msra.mxu0 %v731
    %754 = vmatprep.subr.bf16.mxu0 0
    %755 = vmatpush1.bf16.msra.mxu0 %v732
    %756 = vmatprep.subr.bf16.mxu0 0
    %757 = vmatpush1.bf16.msra.mxu0 %v733
    %758 = vmatprep.subr.bf16.mxu0 0
    %759 = vmatpush1.bf16.msra.mxu0 0
    %760 = vmatprep.subr.bf16.mxu0 0
    %761 = vmatpush1.bf16.msra.mxu0 0
    %762 = vmatprep.subr.bf16.mxu0 0
    %763 = vmatpush1.bf16.msra.mxu0 0
    %764 = vmatprep.subr.bf16.mxu0 0
    %765 = vmatpush1.bf16.msra.mxu0 0
    %766 = vmatprep.subr.bf16.mxu0 0
    %767 = vmatpush1.bf16.msra.mxu0 0
    %768 = vmatprep.subr.bf16.mxu0 0
    %769 = vmatpush1.bf16.msra.mxu0 0
    %770 = vmatprep.subr.bf16.mxu0 0
    %771 = vmatpush1.bf16.msra.mxu0 0
    %772 = vmatprep.subr.bf16.mxu0 0
    %773 = vmatpush1.bf16.msra.mxu0 0
    %774 = vmatprep.mubr.bf16.mxu0 0
    %775 = vmatmul.mubr.bf16.gmra.mrb[0].mxu0 %v636
    %v776 = vpop.f32.mrb[0].mxu0
    %v777 = vadd.f32 0.0, %v776
    %v778 = vpop.f32.mrb[0].mxu0
    %v779 = vpop.f32.mrb[0].mxu0
    %v780 = vpop.f32.mrb[0].mxu0
    %781 = vdwg.mxu0
    %v782 = vmul.f32 %v777, 9e-05
    %v783 = vadd.f32 %v511, %v782
    %v784 = vpack.c.bf16 %v672, %v672
    %v786 = vsel %vm366, %v784, 0
    %v789 = vsel %vm370, %v512, 0
    %791 = vmatprep.subr.bf16.mxu0 0
    %792 = vmatpush1.bf16.msra.mxu0 %v789
    %793 = vmatprep.subr.bf16.mxu0 0
    %794 = vmatpush1.bf16.msra.mxu0 0
    %795 = vmatprep.subr.bf16.mxu0 0
    %796 = vmatpush1.bf16.msra.mxu0 0
    %797 = vmatprep.subr.bf16.mxu0 0
    %798 = vmatpush1.bf16.msra.mxu0 0
    %799 = vmatprep.subr.bf16.mxu0 0
    %800 = vmatpush1.bf16.msra.mxu0 0
    %801 = vmatprep.subr.bf16.mxu0 0
    %802 = vmatpush1.bf16.msra.mxu0 0
    %803 = vmatprep.subr.bf16.mxu0 0
    %804 = vmatpush1.bf16.msra.mxu0 0
    %805 = vmatprep.subr.bf16.mxu0 0
    %806 = vmatpush1.bf16.msra.mxu0 0
    %807 = vmatprep.subr.bf16.mxu0 0
    %808 = vmatpush1.bf16.msra.mxu0 0
    %809 = vmatprep.subr.bf16.mxu0 0
    %810 = vmatpush1.bf16.msra.mxu0 0
    %811 = vmatprep.subr.bf16.mxu0 0
    %812 = vmatpush1.bf16.msra.mxu0 0
    %813 = vmatprep.subr.bf16.mxu0 0
    %814 = vmatpush1.bf16.msra.mxu0 0
    %815 = vmatprep.subr.bf16.mxu0 0
    %816 = vmatpush1.bf16.msra.mxu0 0
    %817 = vmatprep.subr.bf16.mxu0 0
    %818 = vmatpush1.bf16.msra.mxu0 0
    %819 = vmatprep.subr.bf16.mxu0 0
    %820 = vmatpush1.bf16.msra.mxu0 0
    %821 = vmatprep.subr.bf16.mxu0 0
    %822 = vmatpush1.bf16.msra.mxu0 0
    %823 = vmatprep.mubr.bf16.mxu0 0
    %824 = vmatmul.mubr.bf16.gmra.mrb[0].mxu0 %v786
    %v825 = vpop.f32.mrb[0].mxu0
    %v826 = vadd.f32 0.0, %v825
    %v827 = vpop.f32.mrb[0].mxu0
    %v828 = vpop.f32.mrb[0].mxu0
    %v829 = vpop.f32.mrb[0].mxu0
    %830 = vdwg.mxu0
    %v831 = vmul.f32 %v826, 1.25e-06
    %v832 = vadd.f32 %v783, %v831
    %v833 = vpack.c.bf16 %v832, %v832
    %834 = vmatprep.subr.bf16.mxu0 0
    %835 = vmatpush1.bf16.xpose.msra.mxu0 %v833
    %836 = vmatprep.subr.bf16.mxu0 0
    %837 = vmatpush1.bf16.xpose.msra.mxu0 0
    %838 = vmatprep.subr.bf16.mxu0 0
    %839 = vmatpush1.bf16.xpose.msra.mxu0 0
    %840 = vmatprep.subr.bf16.mxu0 0
    %841 = vmatpush1.bf16.xpose.msra.mxu0 0
    %842 = vmatprep.subr.bf16.mxu0 0
    %843 = vmatpush1.bf16.xpose.msra.mxu0 0
    %844 = vmatprep.subr.bf16.mxu0 0
    %845 = vmatpush1.bf16.xpose.msra.mxu0 0
    %846 = vmatprep.subr.bf16.mxu0 0
    %847 = vmatpush1.bf16.xpose.msra.mxu0 0
    %848 = vmatprep.subr.bf16.mxu0 0
    %849 = vmatpush1.bf16.xpose.msra.mxu0 0
    %850 = vmatprep.subr.bf16.mxu0 0
    %851 = vmatpush1.bf16.xpose.msra.mxu0 0
    %852 = vmatprep.subr.bf16.mxu0 0
    %853 = vmatpush1.bf16.xpose.msra.mxu0 0
    %854 = vmatprep.subr.bf16.mxu0 0
    %855 = vmatpush1.bf16.xpose.msra.mxu0 0
    %856 = vmatprep.subr.bf16.mxu0 0
    %857 = vmatpush1.bf16.xpose.msra.mxu0 0
    %858 = vmatprep.subr.bf16.mxu0 0
    %859 = vmatpush1.bf16.xpose.msra.mxu0 0
    %860 = vmatprep.subr.bf16.mxu0 0
    %861 = vmatpush1.bf16.xpose.msra.mxu0 0
    %862 = vmatprep.subr.bf16.mxu0 0
    %863 = vmatpush1.bf16.xpose.msra.mxu0 0
    %864 = vmatprep.subr.bf16.mxu0 0
    %865 = vmatpush1.bf16.xpose.msra.mxu0 0
    %866 = vmatprep.mubr.bf16.mxu0 0
    %867 = vmatmul.mubr.bf16.gmra.mrb[0].mxu0 %v833
    %v868 = vpop.f32.mrb[0].mxu0
    %v869 = vadd.f32 0.0, %v868
    %v870 = vpop.f32.mrb[0].mxu0
    %v871 = vpop.f32.mrb[0].mxu0
    %v872 = vpop.f32.mrb[0].mxu0
    %873 = vdwg.mxu0
    %v874 = vpack.c.bf16 %v869, %v869
    %v876 = vsel %vm366, %v874, 0
    %v879 = vsel %vm370, %v833, 0
    %881 = vmatprep.subr.bf16.mxu0 0
    %882 = vmatpush1.bf16.msra.mxu0 %v879
    %883 = vmatprep.subr.bf16.mxu0 0
    %884 = vmatpush1.bf16.msra.mxu0 0
    %885 = vmatprep.subr.bf16.mxu0 0
    %886 = vmatpush1.bf16.msra.mxu0 0
    %887 = vmatprep.subr.bf16.mxu0 0
    %888 = vmatpush1.bf16.msra.mxu0 0
    %889 = vmatprep.subr.bf16.mxu0 0
    %890 = vmatpush1.bf16.msra.mxu0 0
    %891 = vmatprep.subr.bf16.mxu0 0
    %892 = vmatpush1.bf16.msra.mxu0 0
    %893 = vmatprep.subr.bf16.mxu0 0
    %894 = vmatpush1.bf16.msra.mxu0 0
    %895 = vmatprep.subr.bf16.mxu0 0
    %896 = vmatpush1.bf16.msra.mxu0 0
    %897 = vmatprep.subr.bf16.mxu0 0
    %898 = vmatpush1.bf16.msra.mxu0 0
    %899 = vmatprep.subr.bf16.mxu0 0
    %900 = vmatpush1.bf16.msra.mxu0 0
    %901 = vmatprep.subr.bf16.mxu0 0
    %902 = vmatpush1.bf16.msra.mxu0 0
    %903 = vmatprep.subr.bf16.mxu0 0
    %904 = vmatpush1.bf16.msra.mxu0 0
    %905 = vmatprep.subr.bf16.mxu0 0
    %906 = vmatpush1.bf16.msra.mxu0 0
    %907 = vmatprep.subr.bf16.mxu0 0
    %908 = vmatpush1.bf16.msra.mxu0 0
    %909 = vmatprep.subr.bf16.mxu0 0
    %910 = vmatpush1.bf16.msra.mxu0 0
    %911 = vmatprep.subr.bf16.mxu0 0
    %912 = vmatpush1.bf16.msra.mxu0 0
    %913 = vmatprep.mubr.bf16.mxu0 0
    %914 = vmatmul.mubr.bf16.gmra.mrb[0].mxu0 %v876
    %v915 = vpop.f32.mrb[0].mxu0
    %v916 = vadd.f32 0.0, %v915
    %v917 = vpop.f32.mrb[0].mxu0
    %v918 = vpop.f32.mrb[0].mxu0
    %v919 = vpop.f32.mrb[0].mxu0
    %920 = vdwg.mxu0
    %v921 = vmul.f32 %v916, 1.25e-05
    %v922 = vsub.f32 %v832, %v921
    %v923 = vld [vmem:[#allocation7] sm:$0xff]
    %v924 = vld [vmem:[#allocation7 + $0x8] sm:$0xff]
    %v925 = vld [vmem:[#allocation7 + $0x10] sm:$0xff]
    %v926 = vld [vmem:[#allocation7 + $0x18] sm:$0xff]
    %v927 = vld [vmem:[#allocation7 + $0x20] sm:$0xff]
    %v928 = vld [vmem:[#allocation7 + $0x28] sm:$0xff]
    %v929 = vld [vmem:[#allocation7 + $0x30] sm:$0xff]
    %v930 = vld [vmem:[#allocation7 + $0x38] sm:$0xff]
    %v931 = vld [vmem:[#allocation7 + $0x40] sm:$0xff]
    %v932 = vld [vmem:[#allocation7 + $0x48] sm:$0xff]
    %v933 = vld [vmem:[#allocation7 + $0x50] sm:$0xff]
    %v934 = vld [vmem:[#allocation7 + $0x58] sm:$0xff]
    %v935 = vld [vmem:[#allocation7 + $0x60] sm:$0xff]
    %v936 = vld [vmem:[#allocation7 + $0x68] sm:$0xff]
    %v937 = vld [vmem:[#allocation7 + $0x70] sm:$0xff]
    %v938 = vld [vmem:[#allocation7 + $0x78] sm:$0xff]
    %v939 = vld [vmem:[%s5] sm:$0x1]
    %v941 = vlaneseq
    %v942 = vshrl.u32 %v941, 7
    %v943 = vsub.s32 0, %v942
    %v944 = vrot.slane %v939, %v943
    %946 = vmatprep.subr.mxu0 0.0
    %947 = vmatpush1.msra.mxu0 %v923
    %948 = vmatprep.subr.mxu0 0.0
    %949 = vmatpush1.msra.mxu0 %v924
    %950 = vmatprep.subr.mxu0 0.0
    %951 = vmatpush1.msra.mxu0 %v925
    %952 = vmatprep.subr.mxu0 0.0
    %953 = vmatpush1.msra.mxu0 %v926
    %954 = vmatprep.subr.mxu0 0.0
    %955 = vmatpush1.msra.mxu0 %v927
    %956 = vmatprep.subr.mxu0 0.0
    %957 = vmatpush1.msra.mxu0 %v928
    %958 = vmatprep.subr.mxu0 0.0
    %959 = vmatpush1.msra.mxu0 %v929
    %960 = vmatprep.subr.mxu0 0.0
    %961 = vmatpush1.msra.mxu0 %v930
    %962 = vmatprep.subr.mxu0 0.0
    %963 = vmatpush1.msra.mxu0 %v931
    %964 = vmatprep.subr.mxu0 0.0
    %965 = vmatpush1.msra.mxu0 %v932
    %966 = vmatprep.subr.mxu0 0.0
    %967 = vmatpush1.msra.mxu0 %v933
    %968 = vmatprep.subr.mxu0 0.0
    %969 = vmatpush1.msra.mxu0 %v934
    %970 = vmatprep.subr.mxu0 0.0
    %971 = vmatpush1.msra.mxu0 %v935
    %972 = vmatprep.subr.mxu0 0.0
    %973 = vmatpush1.msra.mxu0 %v936
    %974 = vmatprep.subr.mxu0 0.0
    %975 = vmatpush1.msra.mxu0 %v937
    %976 = vmatprep.subr.mxu0 0.0
    %977 = vmatpush1.msra.mxu0 %v938
    %978 = vmatprep.subr.mxu0 0.0
    %979 = vmatpush1.msra.mxu0 0.0
    %980 = vmatprep.subr.mxu0 0.0
    %981 = vmatpush1.msra.mxu0 0.0
    %982 = vmatprep.subr.mxu0 0.0
    %983 = vmatpush1.msra.mxu0 0.0
    %984 = vmatprep.subr.mxu0 0.0
    %985 = vmatpush1.msra.mxu0 0.0
    %986 = vmatprep.subr.mxu0 0.0
    %987 = vmatpush1.msra.mxu0 0.0
    %988 = vmatprep.subr.mxu0 0.0
    %989 = vmatpush1.msra.mxu0 0.0
    %990 = vmatprep.subr.mxu0 0.0
    %991 = vmatpush1.msra.mxu0 0.0
    %992 = vmatprep.subr.mxu0 0.0
    %993 = vmatpush1.msra.mxu0 0.0
    %994 = vmatprep.subr.mxu0 0.0
    %995 = vmatpush1.msra.mxu0 0.0
    %996 = vmatprep.subr.mxu0 0.0
    %997 = vmatpush1.msra.mxu0 0.0
    %998 = vmatprep.subr.mxu0 0.0
    %999 = vmatpush1.msra.mxu0 0.0
    %1000 = vmatprep.subr.mxu0 0.0
    %1001 = vmatpush1.msra.mxu0 0.0
    %1002 = vmatprep.subr.mxu0 0.0
    %1003 = vmatpush1.msra.mxu0 0.0
    %1004 = vmatprep.subr.mxu0 0.0
    %1005 = vmatpush1.msra.mxu0 0.0
    %1006 = vmatprep.subr.mxu0 0.0
    %1007 = vmatpush1.msra.mxu0 0.0
    %1008 = vmatprep.subr.mxu0 0.0
    %1009 = vmatpush1.msra.mxu0 0.0
    %1010 = vmatprep.mubr.f32.mxu0 0.0
    %1011 = vmatmul.mubr.f32.gmra.mrb[0].mxu0 %v922
    %v1012 = vpop.f32.mrb[0].mxu0
    %v1013 = vadd.f32 %v944, %v1012
    %v1014 = vpop.f32.mrb[0].mxu0
    %1015 = vdwg.mxu0
    %v1016 = vmax.f32 %v1013, 0.0
    %v1017 = vld [vmem:[#allocation8] sm:$0xff]
    %v1018 = vld [vmem:[#allocation8 + $0x8] sm:$0xff]
    %v1019 = vld [vmem:[#allocation8 + $0x10] sm:$0xff]
    %v1020 = vld [vmem:[#allocation8 + $0x18] sm:$0xff]
    %v1021 = vld [vmem:[#allocation8 + $0x20] sm:$0xff]
    %v1022 = vld [vmem:[#allocation8 + $0x28] sm:$0xff]
    %v1023 = vld [vmem:[#allocation8 + $0x30] sm:$0xff]
    %v1024 = vld [vmem:[#allocation8 + $0x38] sm:$0xff]
    %v1025 = vld [vmem:[#allocation8 + $0x40] sm:$0xff]
    %v1026 = vld [vmem:[#allocation8 + $0x48] sm:$0xff]
    %v1027 = vld [vmem:[#allocation8 + $0x50] sm:$0xff]
    %v1028 = vld [vmem:[#allocation8 + $0x58] sm:$0xff]
    %v1029 = vld [vmem:[#allocation8 + $0x60] sm:$0xff]
    %v1030 = vld [vmem:[#allocation8 + $0x68] sm:$0xff]
    %v1031 = vld [vmem:[#allocation8 + $0x70] sm:$0xff]
    %v1032 = vld [vmem:[#allocation8 + $0x78] sm:$0xff]
    %v1033 = vld [vmem:[%s7] sm:$0x1]
    %v1035 = vlaneseq
    %v1036 = vshrl.u32 %v1035, 7
    %v1037 = vsub.s32 0, %v1036
    %v1038 = vrot.slane %v1033, %v1037
    %1040 = vmatprep.subr.mxu0 0.0
    %1041 = vmatpush1.msra.mxu0 %v1017
    %1042 = vmatprep.subr.mxu0 0.0
    %1043 = vmatpush1.msra.mxu0 %v1018
    %1044 = vmatprep.subr.mxu0 0.0
    %1045 = vmatpush1.msra.mxu0 %v1019
    %1046 = vmatprep.subr.mxu0 0.0
    %1047 = vmatpush1.msra.mxu0 %v1020
    %1048 = vmatprep.subr.mxu0 0.0
    %1049 = vmatpush1.msra.mxu0 %v1021
    %1050 = vmatprep.subr.mxu0 0.0
    %1051 = vmatpush1.msra.mxu0 %v1022
    %1052 = vmatprep.subr.mxu0 0.0
    %1053 = vmatpush1.msra.mxu0 %v1023
    %1054 = vmatprep.subr.mxu0 0.0
    %1055 = vmatpush1.msra.mxu0 %v1024
    %1056 = vmatprep.subr.mxu0 0.0
    %1057 = vmatpush1.msra.mxu0 %v1025
    %1058 = vmatprep.subr.mxu0 0.0
    %1059 = vmatpush1.msra.mxu0 %v1026
    %1060 = vmatprep.subr.mxu0 0.0
    %1061 = vmatpush1.msra.mxu0 %v1027
    %1062 = vmatprep.subr.mxu0 0.0
    %1063 = vmatpush1.msra.mxu0 %v1028
    %1064 = vmatprep.subr.mxu0 0.0
    %1065 = vmatpush1.msra.mxu0 %v1029
    %1066 = vmatprep.subr.mxu0 0.0
    %1067 = vmatpush1.msra.mxu0 %v1030
    %1068 = vmatprep.subr.mxu0 0.0
    %1069 = vmatpush1.msra.mxu0 %v1031
    %1070 = vmatprep.subr.mxu0 0.0
    %1071 = vmatpush1.msra.mxu0 %v1032
    %1072 = vmatprep.subr.mxu0 0.0
    %1073 = vmatpush1.msra.mxu0 0.0
    %1074 = vmatprep.subr.mxu0 0.0
    %1075 = vmatpush1.msra.mxu0 0.0
    %1076 = vmatprep.subr.mxu0 0.0
    %1077 = vmatpush1.msra.mxu0 0.0
    %1078 = vmatprep.subr.mxu0 0.0
    %1079 = vmatpush1.msra.mxu0 0.0
    %1080 = vmatprep.subr.mxu0 0.0
    %1081 = vmatpush1.msra.mxu0 0.0
    %1082 = vmatprep.subr.mxu0 0.0
    %1083 = vmatpush1.msra.mxu0 0.0
    %1084 = vmatprep.subr.mxu0 0.0
    %1085 = vmatpush1.msra.mxu0 0.0
    %1086 = vmatprep.subr.mxu0 0.0
    %1087 = vmatpush1.msra.mxu0 0.0
    %1088 = vmatprep.subr.mxu0 0.0
    %1089 = vmatpush1.msra.mxu0 0.0
    %1090 = vmatprep.subr.mxu0 0.0
    %1091 = vmatpush1.msra.mxu0 0.0
    %1092 = vmatprep.subr.mxu0 0.0
    %1093 = vmatpush1.msra.mxu0 0.0
    %1094 = vmatprep.subr.mxu0 0.0
    %1095 = vmatpush1.msra.mxu0 0.0
    %1096 = vmatprep.subr.mxu0 0.0
    %1097 = vmatpush1.msra.mxu0 0.0
    %1098 = vmatprep.subr.mxu0 0.0
    %1099 = vmatpush1.msra.mxu0 0.0
    %1100 = vmatprep.subr.mxu0 0.0
    %1101 = vmatpush1.msra.mxu0 0.0
    %1102 = vmatprep.subr.mxu0 0.0
    %1103 = vmatpush1.msra.mxu0 0.0
    %1104 = vmatprep.mubr.f32.mxu0 0.0
    %1105 = vmatmul.mubr.f32.gmra.mrb[0].mxu0 %v1016
    %v1106 = vpop.f32.mrb[0].mxu0
    %v1107 = vadd.f32 %v1038, %v1106
    %v1108 = vpop.f32.mrb[0].mxu0
    %1109 = vdwg.mxu0
    %1110 = vst [vmem:[#allocation10] sm:$0xff] %v1107
    // Predicated region
    $region50: #{_forward_impl.1} parent=1 // pred_check
      _
    $region51: #{_forward_impl.1} parent=1 // pred_check_branch
      %1112 = sbr.rel (0) target = $region53
    $region52: #{_forward_impl.1} parent=1 // pred_region
      %s1114 = ssub.s32 128, 128
      %1115 = vsyncadd [#allocation4], %s1114
      %s1117 = sshll.u32 [#allocation10], 4
      %s1118 = int_to_ptr.vmem [resolvable:$true] %s1117
      %1120 = dma.vmem_to_hbm [thread:$0]  %s1118, 128, %s8, [#allocation4]
    $region53: #{_forward_impl.1} parent=1 // pred_fallthru
      _
    // Predicated region
    $region54: #{_forward_impl.1} parent=1 // pred_check
      _
    $region55: #{_forward_impl.1} parent=1 // pred_check_branch
      %1122 = sbr.rel (0) target = $region57
    $region56: #{_forward_impl.1} parent=1 // pred_region
      %1123 = dma.done [#allocation4], 128
    $region57: #{_forward_impl.1} parent=1 // pred_fallthru
      _
    %1124 = vsyncpa [#allocation3], 1
    %1125 = vsyncpa [#allocation6], 1
    %1126 = vsyncpa [#allocation9], 1
    %1127 = vsyncpa [#allocation4], 1

</llo_original>
